<compile_context>
chip_gen: v7x
topology: tpu7x:2x2x1
jax: 0.10.0
libtpu: 0.0.40
codegen_flags: <defaults>
</compile_context>

<pallas_src>
import jax
import jax.numpy as jnp
from jax.experimental import pallas as pl
from jax.experimental.pallas import tpu as pltpu

# ---- dimensions implied by the module ----
IN_DIM = 2
H1, H2, H3 = 32, 64, 128           # feature_extractor widths
HEAD_H, HEAD_OUT = 64, 64          # SupCon / SimCLR head: 128 -> 64 -> 64
HEAD_PAD = 128                     # lane-dense padded head width
DEFAULT_BATCH_TILE = 512           # rows per grid step (sweep 256-1024)


def _round_up(x, m):
    return ((x + m - 1) // m) * m


def toynet_kernel(x_ref,
                  w1_ref, b1_ref,
                  w2_ref, b2_ref,
                  w3_ref, b3_ref,
                  hw1_ref, hb1_ref,
                  hw2_ref, hb2_ref,
                  main_ref, head_ref):
    """One batch-tile of the ToyNet forward. Everything lives in VMEM."""
    x = x_ref[...]                                                   # (bm, 2) f32

    # Layer 1 (K=2, N=32): do it on the VPU — two broadcast multiply-adds —
    # instead of wasting a full systolic MXU pass on a 2-deep contraction.
    h = (x[:, 0:1] * w1_ref[0:1, :]
         + x[:, 1:2] * w1_ref[1:2, :]
         + b1_ref[...])
    h = jnp.maximum(h, 0.0)                                          # (bm, 32)

    # feature_extractor layers 2-3: MXU matmuls, f32 accumulation
    h = jnp.dot(h, w2_ref[...], preferred_element_type=jnp.float32) + b2_ref[...]
    h = jnp.maximum(h, 0.0)                                          # (bm, 64)
    h = jnp.dot(h, w3_ref[...], preferred_element_type=jnp.float32) + b3_ref[...]
    main = jnp.maximum(h, 0.0)                                       # (bm, 128)
    main_ref[...] = main.astype(main_ref.dtype)                      # cast at store only

    # head ('SupCon'/'SimCLR'): Linear -> ReLU -> Linear (last layer padded to 128 lanes)
    g = jnp.dot(main, hw1_ref[...], preferred_element_type=jnp.float32) + hb1_ref[...]
    g = jnp.maximum(g, 0.0)                                          # (bm, 64)
    g = jnp.dot(g, hw2_ref[...], preferred_element_type=jnp.float32) + hb2_ref[...]
    head_ref[...] = g.astype(head_ref.dtype)                         # (bm, 128) lane-dense


def toynet_forward(x, params, *, batch_tile=DEFAULT_BATCH_TILE,
                   out_dtype=jnp.bfloat16):
    """x: (B, 2) float32. Returns (main_feats (B,128), head_feats (B,64))."""
    B = x.shape[0]

    # Tile selection: big tiles amortize the ~0.35 us per-grid-step overhead,
    # but keep the grid >= 2 steps so both v7x TensorCores get work.
    bt = max(8, min(batch_tile, _round_up(pl.cdiv(B, 2), 8)))
    B_pad = _round_up(B, bt)
    if B_pad != B:
        x = jnp.pad(x, ((0, B_pad - B), (0, 0)))
    grid = (B_pad // bt,)

    (w1, b1, w2, b2, w3, b3, hw1, hb1, hw2, hb2) = params

    # Zero-pad the final head projection to 128 output lanes (lane-dense store).
    hw2p = jnp.pad(hw2, ((0, 0), (0, HEAD_PAD - hw2.shape[1])))
    hb2p = jnp.pad(hb2, ((0, 0), (0, HEAD_PAD - hb2.shape[1])))

    def row_spec(cols):
        # tile over batch, full feature width
        return pl.BlockSpec((bt, cols), lambda i: (i, 0))

    def full_spec(shape):
        # parameter: same full block at every grid step (no per-step re-DMA)
        nd = len(shape)
        return pl.BlockSpec(shape, lambda i: (0,) * nd)

    weights = (w1, b1, w2, b2, w3, b3, hw1, hb1, hw2p, hb2p)
    in_specs = [row_spec(IN_DIM)] + [full_spec(w.shape) for w in weights]
    out_specs = (row_spec(H3), row_spec(HEAD_PAD))
    out_shape = (jax.ShapeDtypeStruct((B_pad, H3), out_dtype),
                 jax.ShapeDtypeStruct((B_pad, HEAD_PAD), out_dtype))

    # VMEM budget: x + outputs double-buffered, plus resident weights.
    out_itemsize = jnp.dtype(out_dtype).itemsize
    vmem_est = (2 * bt * IN_DIM * 4
                + 2 * bt * (H3 + HEAD_PAD) * out_itemsize
                + 2 * sum(int(w.size) * 4 for w in weights))
    vmem_limit = int(2 * vmem_est) if 2 * vmem_est > (16 << 20) else None

    main_p, head_p = pl.pallas_call(
        toynet_kernel,
        grid=grid,
        in_specs=in_specs,
        out_specs=out_specs,
        out_shape=out_shape,
        compiler_params=pltpu.CompilerParams(
            dimension_semantics=("parallel",),
            vmem_limit_bytes=vmem_limit),
    )(x, *weights)

    # strip batch padding and the head's lane padding
    return main_p[:B], head_p[:B, :HEAD_OUT]


def init_params(key):
    """Deterministic synthetic weights (shapes match ToyNet(head='SupCon')).

    Weights are stored already transposed to (in, out) so the kernel computes
    x @ W + b; biases kept 2-D (1, out) for TPU-friendly broadcasting.
    """
    def linear(key, fan_in, fan_out):
        kw, kb = jax.random.split(key)
        lim = 1.0 / jnp.sqrt(fan_in)
        w = jax.random.uniform(kw, (fan_in, fan_out), jnp.float32, -lim, lim)
        b = jax.random.uniform(kb, (1, fan_out), jnp.float32, -lim, lim)
        return w, b

    keys = jax.random.split(key, 5)
    w1, b1 = linear(keys[0], IN_DIM, H1)
    w2, b2 = linear(keys[1], H1, H2)
    w3, b3 = linear(keys[2], H2, H3)
    hw1, hb1 = linear(keys[3], H3, HEAD_H)
    hw2, hb2 = linear(keys[4], HEAD_H, HEAD_OUT)
    return (w1, b1, w2, b2, w3, b3, hw1, hb1, hw2, hb2)


def toynet_reference(x, params):
    (w1, b1, w2, b2, w3, b3, hw1, hb1, hw2, hb2) = params
    h = jnp.maximum(x @ w1 + b1, 0.0)
    h = jnp.maximum(h @ w2 + b2, 0.0)
    main = jnp.maximum(h @ w3 + b3, 0.0)
    g = jnp.maximum(main @ hw1 + hb1, 0.0)
    head = g @ hw2 + hb2
    return main, head


if __name__ == "__main__":
    key = jax.random.PRNGKey(0)
    k_params, k_x = jax.random.split(key)

    params = init_params(k_params)
    B = 16                                    # small test batch
    x = jax.random.normal(k_x, (B, IN_DIM), dtype=jnp.float32)

    main_feats, head_feats = toynet_forward(x, params)
    jax.block_until_ready((main_feats, head_feats))

    # sanity check against pure-JAX f32 reference (kernel outputs are bf16,
    # rounded only at the store, so compare against the bf16-rounded reference)
    ref_main, ref_head = toynet_reference(x, params)
    assert main_feats.shape == (B, H3) and head_feats.shape == (B, HEAD_OUT)
    ref_main_b = ref_main.astype(jnp.bfloat16).astype(jnp.float32)
    ref_head_b = ref_head.astype(jnp.bfloat16).astype(jnp.float32)
    assert jnp.allclose(main_feats.astype(jnp.float32), ref_main_b,
                        atol=1e-2, rtol=1e-2)
    assert jnp.allclose(head_feats.astype(jnp.float32), ref_head_b,
                        atol=1e-2, rtol=1e-2)

    print("KERNEL_OK")
</pallas_src>

<mosaic_0001>
module attributes {stable_mosaic.version = 11 : i64} {
  func.func @toynet_kernel(%arg0: i32, %arg1: memref<8x2xf32, #tpu.memory_space<vmem>>, %arg2: memref<2x32xf32, #tpu.memory_space<vmem>>, %arg3: memref<1x32xf32, #tpu.memory_space<vmem>>, %arg4: memref<32x64xf32, #tpu.memory_space<vmem>>, %arg5: memref<1x64xf32, #tpu.memory_space<vmem>>, %arg6: memref<64x128xf32, #tpu.memory_space<vmem>>, %arg7: memref<1x128xf32, #tpu.memory_space<vmem>>, %arg8: memref<128x64xf32, #tpu.memory_space<vmem>>, %arg9: memref<1x64xf32, #tpu.memory_space<vmem>>, %arg10: memref<64x128xf32, #tpu.memory_space<vmem>>, %arg11: memref<1x128xf32, #tpu.memory_space<vmem>>, %arg12: memref<8x128xbf16, #tpu.memory_space<vmem>>, %arg13: memref<8x128xbf16, #tpu.memory_space<vmem>>) attributes {dimension_semantics = [#tpu.dimension_semantics<parallel>], iteration_bounds = array<i64: 2>, scalar_prefetch = 0 : i64, scratch_operands = 0 : i64, tpu.core_type = #tpu.core_type<tc>, window_params = [{transform_indices = @transform_0, window_bounds = array<i64: 8, 2>}, {pipeline_mode = #tpu.pipeline_mode<synchronous>, transform_indices = @transform_1, window_bounds = array<i64: 2, 32>}, {pipeline_mode = #tpu.pipeline_mode<synchronous>, transform_indices = @transform_2, window_bounds = array<i64: 1, 32>}, {pipeline_mode = #tpu.pipeline_mode<synchronous>, transform_indices = @transform_3, window_bounds = array<i64: 32, 64>}, {pipeline_mode = #tpu.pipeline_mode<synchronous>, transform_indices = @transform_4, window_bounds = array<i64: 1, 64>}, {pipeline_mode = #tpu.pipeline_mode<synchronous>, transform_indices = @transform_5, window_bounds = array<i64: 64, 128>}, {pipeline_mode = #tpu.pipeline_mode<synchronous>, transform_indices = @transform_6, window_bounds = array<i64: 1, 128>}, {pipeline_mode = #tpu.pipeline_mode<synchronous>, transform_indices = @transform_7, window_bounds = array<i64: 128, 64>}, {pipeline_mode = #tpu.pipeline_mode<synchronous>, transform_indices = @transform_8, window_bounds = array<i64: 1, 64>}, {pipeline_mode = #tpu.pipeline_mode<synchronous>, transform_indices = @transform_9, window_bounds = array<i64: 64, 128>}, {pipeline_mode = #tpu.pipeline_mode<synchronous>, transform_indices = @transform_10, window_bounds = array<i64: 1, 128>}, {transform_indices = @transform_11, window_bounds = array<i64: 8, 128>}, {transform_indices = @transform_12, window_bounds = array<i64: 8, 128>}]} {
    %c0 = arith.constant 0 : index
    %c0_0 = arith.constant 0 : index
    %0 = vector.load %arg1[%c0, %c0_0] : memref<8x2xf32, #tpu.memory_space<vmem>>, vector<8x2xf32>
    %1 = vector.extract_strided_slice %0 {offsets = [0, 0], sizes = [8, 1], strides = [1, 1]} : vector<8x2xf32> to vector<8x1xf32>
    %c0_1 = arith.constant 0 : index
    %c0_2 = arith.constant 0 : index
    %2 = vector.load %arg2[%c0_1, %c0_2] : memref<2x32xf32, #tpu.memory_space<vmem>>, vector<1x32xf32>
    %3 = vector.broadcast %1 : vector<8x1xf32> to vector<8x32xf32>
    %4 = vector.broadcast %2 : vector<1x32xf32> to vector<8x32xf32>
    %5 = arith.mulf %3, %4 : vector<8x32xf32>
    %6 = vector.extract_strided_slice %0 {offsets = [0, 1], sizes = [8, 1], strides = [1, 1]} : vector<8x2xf32> to vector<8x1xf32>
    %c1 = arith.constant 1 : index
    %c0_3 = arith.constant 0 : index
    %7 = vector.load %arg2[%c1, %c0_3] : memref<2x32xf32, #tpu.memory_space<vmem>>, vector<1x32xf32>
    %8 = vector.broadcast %6 : vector<8x1xf32> to vector<8x32xf32>
    %9 = vector.broadcast %7 : vector<1x32xf32> to vector<8x32xf32>
    %10 = arith.mulf %8, %9 : vector<8x32xf32>
    %11 = arith.addf %5, %10 : vector<8x32xf32>
    %c0_4 = arith.constant 0 : index
    %c0_5 = arith.constant 0 : index
    %12 = vector.load %arg3[%c0_4, %c0_5] : memref<1x32xf32, #tpu.memory_space<vmem>>, vector<1x32xf32>
    %13 = vector.broadcast %12 : vector<1x32xf32> to vector<8x32xf32>
    %14 = arith.addf %11, %13 : vector<8x32xf32>
    %cst = arith.constant 0.000000e+00 : f32
    %15 = vector.broadcast %cst : f32 to vector<8x32xf32>
    %16 = arith.maximumf %14, %15 : vector<8x32xf32>
    %c0_6 = arith.constant 0 : index
    %c0_7 = arith.constant 0 : index
    %17 = vector.load %arg4[%c0_6, %c0_7] : memref<32x64xf32, #tpu.memory_space<vmem>>, vector<32x64xf32>
    %cst_8 = arith.constant dense<0.000000e+00> : vector<8x64xf32>
    %18 = tpu.matmul %16, %17, %cst_8 {dimension_numbers = #tpu.dot_dimension_numbers<[1], [0], [0], [1], [0, 0, 1, 1], [], []>} : vector<8x32xf32>, vector<32x64xf32>, vector<8x64xf32> -> vector<8x64xf32>
    %c0_9 = arith.constant 0 : index
    %c0_10 = arith.constant 0 : index
    %19 = vector.load %arg5[%c0_9, %c0_10] : memref<1x64xf32, #tpu.memory_space<vmem>>, vector<1x64xf32>
    %20 = vector.broadcast %19 : vector<1x64xf32> to vector<8x64xf32>
    %21 = arith.addf %18, %20 : vector<8x64xf32>
    %cst_11 = arith.constant 0.000000e+00 : f32
    %22 = vector.broadcast %cst_11 : f32 to vector<8x64xf32>
    %23 = arith.maximumf %21, %22 : vector<8x64xf32>
    %c0_12 = arith.constant 0 : index
    %c0_13 = arith.constant 0 : index
    %24 = vector.load %arg6[%c0_12, %c0_13] : memref<64x128xf32, #tpu.memory_space<vmem>>, vector<64x128xf32>
    %cst_14 = arith.constant dense<0.000000e+00> : vector<8x128xf32>
    %25 = tpu.matmul %23, %24, %cst_14 {dimension_numbers = #tpu.dot_dimension_numbers<[1], [0], [0], [1], [0, 0, 1, 1], [], []>} : vector<8x64xf32>, vector<64x128xf32>, vector<8x128xf32> -> vector<8x128xf32>
    %c0_15 = arith.constant 0 : index
    %c0_16 = arith.constant 0 : index
    %26 = vector.load %arg7[%c0_15, %c0_16] : memref<1x128xf32, #tpu.memory_space<vmem>>, vector<1x128xf32>
    %27 = vector.broadcast %26 : vector<1x128xf32> to vector<8x128xf32>
    %28 = arith.addf %25, %27 : vector<8x128xf32>
    %cst_17 = arith.constant 0.000000e+00 : f32
    %29 = vector.broadcast %cst_17 : f32 to vector<8x128xf32>
    %30 = arith.maximumf %28, %29 : vector<8x128xf32>
    %31 = arith.truncf %30 : vector<8x128xf32> to vector<8x128xbf16>
    %c0_18 = arith.constant 0 : index
    %c0_19 = arith.constant 0 : index
    %32 = vector.load %arg12[%c0_18, %c0_19] : memref<8x128xbf16, #tpu.memory_space<vmem>>, vector<8x128xbf16>
    tpu.vector_store %arg12[%c0_18, %c0_19], %31 {strides = array<i32>} : memref<8x128xbf16, #tpu.memory_space<vmem>>, vector<8x128xbf16>,
    %c0_20 = arith.constant 0 : index
    %c0_21 = arith.constant 0 : index
    %33 = vector.load %arg8[%c0_20, %c0_21] : memref<128x64xf32, #tpu.memory_space<vmem>>, vector<128x64xf32>
    %cst_22 = arith.constant dense<0.000000e+00> : vector<8x64xf32>
    %34 = tpu.matmul %30, %33, %cst_22 {dimension_numbers = #tpu.dot_dimension_numbers<[1], [0], [0], [1], [0, 0, 1, 1], [], []>} : vector<8x128xf32>, vector<128x64xf32>, vector<8x64xf32> -> vector<8x64xf32>
    %c0_23 = arith.constant 0 : index
    %c0_24 = arith.constant 0 : index
    %35 = vector.load %arg9[%c0_23, %c0_24] : memref<1x64xf32, #tpu.memory_space<vmem>>, vector<1x64xf32>
    %36 = vector.broadcast %35 : vector<1x64xf32> to vector<8x64xf32>
    %37 = arith.addf %34, %36 : vector<8x64xf32>
    %cst_25 = arith.constant 0.000000e+00 : f32
    %38 = vector.broadcast %cst_25 : f32 to vector<8x64xf32>
    %39 = arith.maximumf %37, %38 : vector<8x64xf32>
    %c0_26 = arith.constant 0 : index
    %c0_27 = arith.constant 0 : index
    %40 = vector.load %arg10[%c0_26, %c0_27] : memref<64x128xf32, #tpu.memory_space<vmem>>, vector<64x128xf32>
    %cst_28 = arith.constant dense<0.000000e+00> : vector<8x128xf32>
    %41 = tpu.matmul %39, %40, %cst_28 {dimension_numbers = #tpu.dot_dimension_numbers<[1], [0], [0], [1], [0, 0, 1, 1], [], []>} : vector<8x64xf32>, vector<64x128xf32>, vector<8x128xf32> -> vector<8x128xf32>
    %c0_29 = arith.constant 0 : index
    %c0_30 = arith.constant 0 : index
    %42 = vector.load %arg11[%c0_29, %c0_30] : memref<1x128xf32, #tpu.memory_space<vmem>>, vector<1x128xf32>
    %43 = vector.broadcast %42 : vector<1x128xf32> to vector<8x128xf32>
    %44 = arith.addf %41, %43 : vector<8x128xf32>
    %45 = arith.truncf %44 : vector<8x128xf32> to vector<8x128xbf16>
    %c0_31 = arith.constant 0 : index
    %c0_32 = arith.constant 0 : index
    %46 = vector.load %arg13[%c0_31, %c0_32] : memref<8x128xbf16, #tpu.memory_space<vmem>>, vector<8x128xbf16>
    tpu.vector_store %arg13[%c0_31, %c0_32], %45 {strides = array<i32>} : memref<8x128xbf16, #tpu.memory_space<vmem>>, vector<8x128xbf16>,
    return
  }
  func.func @transform_0(%arg0: i32) -> (i32, i32) {
    %c0_i32 = arith.constant 0 : i32
    %c0_i32_0 = arith.constant 0 : i32
    return %arg0, %c0_i32 : i32, i32
  }
  func.func @transform_1(%arg0: i32) -> (i32, i32) {
    %c0_i32 = arith.constant 0 : i32
    %c0_i32_0 = arith.constant 0 : i32
    %c0_i32_1 = arith.constant 0 : i32
    return %c0_i32, %c0_i32_0 : i32, i32
  }
  func.func @transform_2(%arg0: i32) -> (i32, i32) {
    %c0_i32 = arith.constant 0 : i32
    %c0_i32_0 = arith.constant 0 : i32
    %c0_i32_1 = arith.constant 0 : i32
    return %c0_i32, %c0_i32_0 : i32, i32
  }
  func.func @transform_3(%arg0: i32) -> (i32, i32) {
    %c0_i32 = arith.constant 0 : i32
    %c0_i32_0 = arith.constant 0 : i32
    %c0_i32_1 = arith.constant 0 : i32
    return %c0_i32, %c0_i32_0 : i32, i32
  }
  func.func @transform_4(%arg0: i32) -> (i32, i32) {
    %c0_i32 = arith.constant 0 : i32
    %c0_i32_0 = arith.constant 0 : i32
    %c0_i32_1 = arith.constant 0 : i32
    return %c0_i32, %c0_i32_0 : i32, i32
  }
  func.func @transform_5(%arg0: i32) -> (i32, i32) {
    %c0_i32 = arith.constant 0 : i32
    %c0_i32_0 = arith.constant 0 : i32
    %c0_i32_1 = arith.constant 0 : i32
    return %c0_i32, %c0_i32_0 : i32, i32
  }
  func.func @transform_6(%arg0: i32) -> (i32, i32) {
    %c0_i32 = arith.constant 0 : i32
    %c0_i32_0 = arith.constant 0 : i32
    %c0_i32_1 = arith.constant 0 : i32
    return %c0_i32, %c0_i32_0 : i32, i32
  }
  func.func @transform_7(%arg0: i32) -> (i32, i32) {
    %c0_i32 = arith.constant 0 : i32
    %c0_i32_0 = arith.constant 0 : i32
    %c0_i32_1 = arith.constant 0 : i32
    return %c0_i32, %c0_i32_0 : i32, i32
  }
  func.func @transform_8(%arg0: i32) -> (i32, i32) {
    %c0_i32 = arith.constant 0 : i32
    %c0_i32_0 = arith.constant 0 : i32
    %c0_i32_1 = arith.constant 0 : i32
    return %c0_i32, %c0_i32_0 : i32, i32
  }
  func.func @transform_9(%arg0: i32) -> (i32, i32) {
    %c0_i32 = arith.constant 0 : i32
    %c0_i32_0 = arith.constant 0 : i32
    %c0_i32_1 = arith.constant 0 : i32
    return %c0_i32, %c0_i32_0 : i32, i32
  }
  func.func @transform_10(%arg0: i32) -> (i32, i32) {
    %c0_i32 = arith.constant 0 : i32
    %c0_i32_0 = arith.constant 0 : i32
    %c0_i32_1 = arith.constant 0 : i32
    return %c0_i32, %c0_i32_0 : i32, i32
  }
  func.func @transform_11(%arg0: i32) -> (i32, i32) {
    %c0_i32 = arith.constant 0 : i32
    %c0_i32_0 = arith.constant 0 : i32
    return %arg0, %c0_i32 : i32, i32
  }
  func.func @transform_12(%arg0: i32) -> (i32, i32) {
    %c0_i32 = arith.constant 0 : i32
    %c0_i32_0 = arith.constant 0 : i32
    return %arg0, %c0_i32 : i32, i32
  }
}

</mosaic_0001>

<llo_original>
// kernel: tpu_custom_call.1
$region0: #{tpu_custom_call.1}
  #allocation0 [shape = 'u32[]', space=smem, size = 0x4, offset = 0x4, fixed_abs, tag = 'smem constant byte address 0x4 - core index']
  #allocation1 [shape = 'u32[144,128]{1,0:T(1,128)}', space=vmem, size = 0x12000, scoped, tag = 'internal scratch']
  %s0 = inlined_call_operand.vmem [shape: f32[16,2], index: 0, kind: input, shape index: {}]
  %s1 = inlined_call_operand.vmem [shape: f32[2,32], index: 1, kind: input, shape index: {}]
  %s2 = inlined_call_operand.vmem [shape: f32[1,32], index: 2, kind: input, shape index: {}]
  %s3 = inlined_call_operand.vmem [shape: f32[32,64], index: 3, kind: input, shape index: {}]
  %s4 = inlined_call_operand.vmem [shape: f32[1,64], index: 4, kind: input, shape index: {}]
  %s5 = inlined_call_operand.vmem [shape: f32[64,128], index: 5, kind: input, shape index: {}]
  %s6 = inlined_call_operand.vmem [shape: f32[1,128], index: 6, kind: input, shape index: {}]
  %s7 = inlined_call_operand.vmem [shape: f32[128,64], index: 7, kind: input, shape index: {}]
  %s8 = inlined_call_operand.vmem [shape: f32[1,64], index: 8, kind: input, shape index: {}]
  %s9 = inlined_call_operand.vmem [shape: f32[64,128], index: 9, kind: input, shape index: {}]
  %s10 = inlined_call_operand.vmem [shape: f32[1,128], index: 10, kind: input, shape index: {}]
  %s11 = inlined_call_operand.hbm [shape: bf16[16,128], index: 11, kind: output, shape index: {0}]
  %s12 = inlined_call_operand.hbm [shape: bf16[16,128], index: 12, kind: output, shape index: {1}]
  %13 = xla_tuple %s11, %s12
  %s14 = sld [smem:[#allocation0]]
  $region85: #{tpu_custom_call.1} parent=0
    _
  %s16 = ssub.s32 1, %s14
  %s17 = scalar_select 0, %s16, %s14
  $region1: #{tpu_custom_call.1} parent=0
    #allocation2 [shape = 'u8[4096]{0}', space=vmem, size = 0x1000, scoped, tag = 'output window, operand 0']
    #allocation3 [shape = 's32[2]{0}', space=sflag, size = 0x8, scoped, tag = 'scoped memory for tpu_custom_call.1']
    #allocation4 [shape = 'u8[4096]{0}', space=vmem, size = 0x1000, scoped, tag = 'output window, operand 1']
    #allocation5 [shape = 's32[2]{0}', space=sflag, size = 0x8, scoped, tag = 'scoped memory for tpu_custom_call.1']
    %18 = vsyncpa [#allocation3], 0
    %s19 = scalar_lea.sflag [#allocation3], 1
    %20 = vsyncpa %s19, 0
    %21 = vsyncpa [#allocation5], 0
    %s22 = scalar_lea.sflag [#allocation5], 1
    %23 = vsyncpa %s22, 0
    loop: start=0, step=1, limit=4
    $region2: #{tpu_custom_call.1} parent=1 // loop_pre_header
      _
    $region3: #{tpu_custom_call.1} parent=1 // loop_header
      %s25 = sphi 0, %s29
      %p26 = scmp.ge.s32.totalorder %s25, 4
      %s35 = sphi 0, %s37
      %s38 = sphi 0, %s35
      %s39 = sphi 0, %s38
      %s55 = sphi 0, %s39
      %s59 = sphi 0, %s59
      %s61 = sphi 0, %s59
      %s62 = sphi 0, %s61
      %s76 = sphi 0, %s62
      %s80 = sphi 0, %s80
      %s82 = sphi 0, %s80
      %s83 = sphi 0, %s82
      %s97 = sphi 0, %s83
      %s101 = sphi 0, %s101
      %s103 = sphi 0, %s101
      %s104 = sphi 0, %s103
      %s118 = sphi 0, %s104
      %s122 = sphi 0, %s122
      %s124 = sphi 0, %s122
      %s125 = sphi 0, %s124
      %s139 = sphi 0, %s125
      %s143 = sphi 0, %s143
      %s145 = sphi 0, %s143
      %s146 = sphi 0, %s145
      %s160 = sphi 0, %s146
      %s164 = sphi 0, %s164
      %s166 = sphi 0, %s164
      %s167 = sphi 0, %s166
      %s181 = sphi 0, %s167
      %s185 = sphi 0, %s185
      %s187 = sphi 0, %s185
      %s188 = sphi 0, %s187
      %s202 = sphi 0, %s188
      %s206 = sphi 0, %s206
      %s208 = sphi 0, %s206
      %s209 = sphi 0, %s208
      %s223 = sphi 0, %s209
      %s227 = sphi 0, %s227
      %s229 = sphi 0, %s227
      %s230 = sphi 0, %s229
      %s244 = sphi 0, %s230
      %s248 = sphi 0, %s248
      %s250 = sphi 0, %s248
      %s251 = sphi 0, %s250
      %s265 = sphi 0, %s251
      %s271 = sphi 0, %s273
      %s274 = sphi 0, %s271
      %s275 = sphi 0, %s274
      %s291 = sphi 0, %s275
      %s297 = sphi 0, %s299
      %s300 = sphi 0, %s297
      %s301 = sphi 0, %s300
      %s317 = sphi 0, %s301
    $region4: #{tpu_custom_call.1} parent=1 // loop_header_branch
      %28 = sbr.rel (%p26) target = $region8
    $region5: #{tpu_custom_call.1} parent=1 // loop_body
      %s30 = ssub.s32 %s25, 1
      %s31 = ssub.s32 %s25, 2
      %s32 = sadd.s32 %s25, 1
      %s33 = ssub.s32 %s25, %s32
      %p34 = scmp.eq.s32.totalorder %s33, 0
      %s36 = sadd.s32 %s35, 1
      %s37 = scalar_select %p34, %s35, %s36
      %p40 = pneg %p34
      %p41 = scmp.eq.s32.totalorder %s25, 1
      %p42 = por %p40, %p41
      %p43 = scmp.ne.s32.totalorder %s35, %s38
      %p44 = scmp.eq.s32.totalorder %s25, 0
      %p45 = por %p43, %p44
      %p46 = scmp.ne.s32.totalorder %s35, %s38
      %p47 = scmp.eq.s32.totalorder %s30, 1
      %p48 = por %p46, %p47
      %p49 = scmp.ne.s32.totalorder %s38, %s39
      %p50 = scmp.eq.s32.totalorder %s30, 0
      %p51 = por %p49, %p50
      %p52 = scmp.ne.s32.totalorder %s38, %s39
      %p53 = scmp.eq.s32.totalorder %s31, 1
      %p54 = por %p52, %p53
      %p56 = scmp.ne.s32.totalorder %s39, %s55
      %p57 = scmp.eq.s32.totalorder %s31, 0
      %p58 = por %p56, %p57
      %s60 = sadd.s32 %s59, 1
      %p63 = scmp.eq.s32.totalorder %s25, 1
      %p64 = scmp.ne.s32.totalorder %s59, %s61
      %p65 = scmp.eq.s32.totalorder %s25, 0
      %p66 = por %p64, %p65
      %p67 = scmp.ne.s32.totalorder %s59, %s61
      %p68 = scmp.eq.s32.totalorder %s30, 1
      %p69 = por %p67, %p68
      %p70 = scmp.ne.s32.totalorder %s61, %s62
      %p71 = scmp.eq.s32.totalorder %s30, 0
      %p72 = por %p70, %p71
      %p73 = scmp.ne.s32.totalorder %s61, %s62
      %p74 = scmp.eq.s32.totalorder %s31, 1
      %p75 = por %p73, %p74
      %p77 = scmp.ne.s32.totalorder %s62, %s76
      %p78 = scmp.eq.s32.totalorder %s31, 0
      %p79 = por %p77, %p78
      %s81 = sadd.s32 %s80, 1
      %p84 = scmp.eq.s32.totalorder %s25, 1
      %p85 = scmp.ne.s32.totalorder %s80, %s82
      %p86 = scmp.eq.s32.totalorder %s25, 0
      %p87 = por %p85, %p86
      %p88 = scmp.ne.s32.totalorder %s80, %s82
      %p89 = scmp.eq.s32.totalorder %s30, 1
      %p90 = por %p88, %p89
      %p91 = scmp.ne.s32.totalorder %s82, %s83
      %p92 = scmp.eq.s32.totalorder %s30, 0
      %p93 = por %p91, %p92
      %p94 = scmp.ne.s32.totalorder %s82, %s83
      %p95 = scmp.eq.s32.totalorder %s31, 1
      %p96 = por %p94, %p95
      %p98 = scmp.ne.s32.totalorder %s83, %s97
      %p99 = scmp.eq.s32.totalorder %s31, 0
      %p100 = por %p98, %p99
      %s102 = sadd.s32 %s101, 1
      %p105 = scmp.eq.s32.totalorder %s25, 1
      %p106 = scmp.ne.s32.totalorder %s101, %s103
      %p107 = scmp.eq.s32.totalorder %s25, 0
      %p108 = por %p106, %p107
      %p109 = scmp.ne.s32.totalorder %s101, %s103
      %p110 = scmp.eq.s32.totalorder %s30, 1
      %p111 = por %p109, %p110
      %p112 = scmp.ne.s32.totalorder %s103, %s104
      %p113 = scmp.eq.s32.totalorder %s30, 0
      %p114 = por %p112, %p113
      %p115 = scmp.ne.s32.totalorder %s103, %s104
      %p116 = scmp.eq.s32.totalorder %s31, 1
      %p117 = por %p115, %p116
      %p119 = scmp.ne.s32.totalorder %s104, %s118
      %p120 = scmp.eq.s32.totalorder %s31, 0
      %p121 = por %p119, %p120
      %s123 = sadd.s32 %s122, 1
      %p126 = scmp.eq.s32.totalorder %s25, 1
      %p127 = scmp.ne.s32.totalorder %s122, %s124
      %p128 = scmp.eq.s32.totalorder %s25, 0
      %p129 = por %p127, %p128
      %p130 = scmp.ne.s32.totalorder %s122, %s124
      %p131 = scmp.eq.s32.totalorder %s30, 1
      %p132 = por %p130, %p131
      %p133 = scmp.ne.s32.totalorder %s124, %s125
      %p134 = scmp.eq.s32.totalorder %s30, 0
      %p135 = por %p133, %p134
      %p136 = scmp.ne.s32.totalorder %s124, %s125
      %p137 = scmp.eq.s32.totalorder %s31, 1
      %p138 = por %p136, %p137
      %p140 = scmp.ne.s32.totalorder %s125, %s139
      %p141 = scmp.eq.s32.totalorder %s31, 0
      %p142 = por %p140, %p141
      %s144 = sadd.s32 %s143, 1
      %p147 = scmp.eq.s32.totalorder %s25, 1
      %p148 = scmp.ne.s32.totalorder %s143, %s145
      %p149 = scmp.eq.s32.totalorder %s25, 0
      %p150 = por %p148, %p149
      %p151 = scmp.ne.s32.totalorder %s143, %s145
      %p152 = scmp.eq.s32.totalorder %s30, 1
      %p153 = por %p151, %p152
      %p154 = scmp.ne.s32.totalorder %s145, %s146
      %p155 = scmp.eq.s32.totalorder %s30, 0
      %p156 = por %p154, %p155
      %p157 = scmp.ne.s32.totalorder %s145, %s146
      %p158 = scmp.eq.s32.totalorder %s31, 1
      %p159 = por %p157, %p158
      %p161 = scmp.ne.s32.totalorder %s146, %s160
      %p162 = scmp.eq.s32.totalorder %s31, 0
      %p163 = por %p161, %p162
      %s165 = sadd.s32 %s164, 1
      %p168 = scmp.eq.s32.totalorder %s25, 1
      %p169 = scmp.ne.s32.totalorder %s164, %s166
      %p170 = scmp.eq.s32.totalorder %s25, 0
      %p171 = por %p169, %p170
      %p172 = scmp.ne.s32.totalorder %s164, %s166
      %p173 = scmp.eq.s32.totalorder %s30, 1
      %p174 = por %p172, %p173
      %p175 = scmp.ne.s32.totalorder %s166, %s167
      %p176 = scmp.eq.s32.totalorder %s30, 0
      %p177 = por %p175, %p176
      %p178 = scmp.ne.s32.totalorder %s166, %s167
      %p179 = scmp.eq.s32.totalorder %s31, 1
      %p180 = por %p178, %p179
      %p182 = scmp.ne.s32.totalorder %s167, %s181
      %p183 = scmp.eq.s32.totalorder %s31, 0
      %p184 = por %p182, %p183
      %s186 = sadd.s32 %s185, 1
      %p189 = scmp.eq.s32.totalorder %s25, 1
      %p190 = scmp.ne.s32.totalorder %s185, %s187
      %p191 = scmp.eq.s32.totalorder %s25, 0
      %p192 = por %p190, %p191
      %p193 = scmp.ne.s32.totalorder %s185, %s187
      %p194 = scmp.eq.s32.totalorder %s30, 1
      %p195 = por %p193, %p194
      %p196 = scmp.ne.s32.totalorder %s187, %s188
      %p197 = scmp.eq.s32.totalorder %s30, 0
      %p198 = por %p196, %p197
      %p199 = scmp.ne.s32.totalorder %s187, %s188
      %p200 = scmp.eq.s32.totalorder %s31, 1
      %p201 = por %p199, %p200
      %p203 = scmp.ne.s32.totalorder %s188, %s202
      %p204 = scmp.eq.s32.totalorder %s31, 0
      %p205 = por %p203, %p204
      %s207 = sadd.s32 %s206, 1
      %p210 = scmp.eq.s32.totalorder %s25, 1
      %p211 = scmp.ne.s32.totalorder %s206, %s208
      %p212 = scmp.eq.s32.totalorder %s25, 0
      %p213 = por %p211, %p212
      %p214 = scmp.ne.s32.totalorder %s206, %s208
      %p215 = scmp.eq.s32.totalorder %s30, 1
      %p216 = por %p214, %p215
      %p217 = scmp.ne.s32.totalorder %s208, %s209
      %p218 = scmp.eq.s32.totalorder %s30, 0
      %p219 = por %p217, %p218
      %p220 = scmp.ne.s32.totalorder %s208, %s209
      %p221 = scmp.eq.s32.totalorder %s31, 1
      %p222 = por %p220, %p221
      %p224 = scmp.ne.s32.totalorder %s209, %s223
      %p225 = scmp.eq.s32.totalorder %s31, 0
      %p226 = por %p224, %p225
      %s228 = sadd.s32 %s227, 1
      %p231 = scmp.eq.s32.totalorder %s25, 1
      %p232 = scmp.ne.s32.totalorder %s227, %s229
      %p233 = scmp.eq.s32.totalorder %s25, 0
      %p234 = por %p232, %p233
      %p235 = scmp.ne.s32.totalorder %s227, %s229
      %p236 = scmp.eq.s32.totalorder %s30, 1
      %p237 = por %p235, %p236
      %p238 = scmp.ne.s32.totalorder %s229, %s230
      %p239 = scmp.eq.s32.totalorder %s30, 0
      %p240 = por %p238, %p239
      %p241 = scmp.ne.s32.totalorder %s229, %s230
      %p242 = scmp.eq.s32.totalorder %s31, 1
      %p243 = por %p241, %p242
      %p245 = scmp.ne.s32.totalorder %s230, %s244
      %p246 = scmp.eq.s32.totalorder %s31, 0
      %p247 = por %p245, %p246
      %s249 = sadd.s32 %s248, 1
      %p252 = scmp.eq.s32.totalorder %s25, 1
      %p253 = scmp.ne.s32.totalorder %s248, %s250
      %p254 = scmp.eq.s32.totalorder %s25, 0
      %p255 = por %p253, %p254
      %p256 = scmp.ne.s32.totalorder %s248, %s250
      %p257 = scmp.eq.s32.totalorder %s30, 1
      %p258 = por %p256, %p257
      %p259 = scmp.ne.s32.totalorder %s250, %s251
      %p260 = scmp.eq.s32.totalorder %s30, 0
      %p261 = por %p259, %p260
      %p262 = scmp.ne.s32.totalorder %s250, %s251
      %p263 = scmp.eq.s32.totalorder %s31, 1
      %p264 = por %p262, %p263
      %p266 = scmp.ne.s32.totalorder %s251, %s265
      %p267 = scmp.eq.s32.totalorder %s31, 0
      %p268 = por %p266, %p267
      %s269 = ssub.s32 %s25, %s32
      %p270 = scmp.eq.s32.totalorder %s269, 0
      %s272 = sadd.s32 %s271, 1
      %s273 = scalar_select %p270, %s271, %s272
      %p276 = pneg %p270
      %p277 = scmp.eq.s32.totalorder %s25, 1
      %p278 = por %p276, %p277
      %p279 = scmp.ne.s32.totalorder %s271, %s274
      %p280 = scmp.eq.s32.totalorder %s25, 0
      %p281 = por %p279, %p280
      %p282 = scmp.ne.s32.totalorder %s271, %s274
      %p283 = scmp.eq.s32.totalorder %s30, 1
      %p284 = por %p282, %p283
      %p285 = scmp.ne.s32.totalorder %s274, %s275
      %p286 = scmp.eq.s32.totalorder %s30, 0
      %p287 = por %p285, %p286
      %p288 = scmp.ne.s32.totalorder %s274, %s275
      %p289 = scmp.eq.s32.totalorder %s31, 1
      %p290 = por %p288, %p289
      %p292 = scmp.ne.s32.totalorder %s275, %s291
      %p293 = scmp.eq.s32.totalorder %s31, 0
      %p294 = por %p292, %p293
      %s295 = ssub.s32 %s25, %s32
      %p296 = scmp.eq.s32.totalorder %s295, 0
      %s298 = sadd.s32 %s297, 1
      %s299 = scalar_select %p296, %s297, %s298
      %p302 = pneg %p296
      %p303 = scmp.eq.s32.totalorder %s25, 1
      %p304 = por %p302, %p303
      %p305 = scmp.ne.s32.totalorder %s297, %s300
      %p306 = scmp.eq.s32.totalorder %s25, 0
      %p307 = por %p305, %p306
      %p308 = scmp.ne.s32.totalorder %s297, %s300
      %p309 = scmp.eq.s32.totalorder %s30, 1
      %p310 = por %p308, %p309
      %p311 = scmp.ne.s32.totalorder %s300, %s301
      %p312 = scmp.eq.s32.totalorder %s30, 0
      %p313 = por %p311, %p312
      %p314 = scmp.ne.s32.totalorder %s300, %s301
      %p315 = scmp.eq.s32.totalorder %s31, 1
      %p316 = por %p314, %p315
      %p318 = scmp.ne.s32.totalorder %s301, %s317
      %p319 = scmp.eq.s32.totalorder %s31, 0
      %p320 = por %p318, %p319
      %p321 = scmp.le.s32.totalorder 1, %s25
      %p322 = scmp.lt.s32.totalorder %s25, 3
      %p323 = pnand %p321, %p322
      %p324 = pneg %p323
      // Predicated region
      $region9: #{tpu_custom_call.1} parent=5 // pred_check
        _
      $region10: #{tpu_custom_call.1} parent=5 // pred_check_branch
        %326 = sbr.rel (%p323) target = $region12
      $region11: #{tpu_custom_call.1} parent=5 // pred_region
        %s327 = ssub.s32 %s25, 1
        // Predicated region
        $region13: #{tpu_custom_call.1} parent=11 // pred_check
          %p328 = pneg %p72
        $region14: #{tpu_custom_call.1} parent=11 // pred_check_branch
          %330 = sbr.rel (%p328) target = $region16
        $region15: #{tpu_custom_call.1} parent=11 // pred_region
          _
        $region16: #{tpu_custom_call.1} parent=11 // pred_fallthru
          _
        // Predicated region
        $region17: #{tpu_custom_call.1} parent=11 // pred_check
          %p331 = pneg %p93
        $region18: #{tpu_custom_call.1} parent=11 // pred_check_branch
          %333 = sbr.rel (%p331) target = $region20
        $region19: #{tpu_custom_call.1} parent=11 // pred_region
          _
        $region20: #{tpu_custom_call.1} parent=11 // pred_fallthru
          _
        // Predicated region
        $region21: #{tpu_custom_call.1} parent=11 // pred_check
          %p334 = pneg %p114
        $region22: #{tpu_custom_call.1} parent=11 // pred_check_branch
          %336 = sbr.rel (%p334) target = $region24
        $region23: #{tpu_custom_call.1} parent=11 // pred_region
          _
        $region24: #{tpu_custom_call.1} parent=11 // pred_fallthru
          _
        // Predicated region
        $region25: #{tpu_custom_call.1} parent=11 // pred_check
          %p337 = pneg %p135
        $region26: #{tpu_custom_call.1} parent=11 // pred_check_branch
          %339 = sbr.rel (%p337) target = $region28
        $region27: #{tpu_custom_call.1} parent=11 // pred_region
          _
        $region28: #{tpu_custom_call.1} parent=11 // pred_fallthru
          _
        // Predicated region
        $region29: #{tpu_custom_call.1} parent=11 // pred_check
          %p340 = pneg %p156
        $region30: #{tpu_custom_call.1} parent=11 // pred_check_branch
          %342 = sbr.rel (%p340) target = $region32
        $region31: #{tpu_custom_call.1} parent=11 // pred_region
          _
        $region32: #{tpu_custom_call.1} parent=11 // pred_fallthru
          _
        // Predicated region
        $region33: #{tpu_custom_call.1} parent=11 // pred_check
          %p343 = pneg %p177
        $region34: #{tpu_custom_call.1} parent=11 // pred_check_branch
          %345 = sbr.rel (%p343) target = $region36
        $region35: #{tpu_custom_call.1} parent=11 // pred_region
          _
        $region36: #{tpu_custom_call.1} parent=11 // pred_fallthru
          _
        // Predicated region
        $region37: #{tpu_custom_call.1} parent=11 // pred_check
          %p346 = pneg %p198
        $region38: #{tpu_custom_call.1} parent=11 // pred_check_branch
          %348 = sbr.rel (%p346) target = $region40
        $region39: #{tpu_custom_call.1} parent=11 // pred_region
          _
        $region40: #{tpu_custom_call.1} parent=11 // pred_fallthru
          _
        // Predicated region
        $region41: #{tpu_custom_call.1} parent=11 // pred_check
          %p349 = pneg %p219
        $region42: #{tpu_custom_call.1} parent=11 // pred_check_branch
          %351 = sbr.rel (%p349) target = $region44
        $region43: #{tpu_custom_call.1} parent=11 // pred_region
          _
        $region44: #{tpu_custom_call.1} parent=11 // pred_fallthru
          _
        // Predicated region
        $region45: #{tpu_custom_call.1} parent=11 // pred_check
          %p352 = pneg %p240
        $region46: #{tpu_custom_call.1} parent=11 // pred_check_branch
          %354 = sbr.rel (%p352) target = $region48
        $region47: #{tpu_custom_call.1} parent=11 // pred_region
          _
        $region48: #{tpu_custom_call.1} parent=11 // pred_fallthru
          _
        // Predicated region
        $region49: #{tpu_custom_call.1} parent=11 // pred_check
          %p355 = pneg %p261
        $region50: #{tpu_custom_call.1} parent=11 // pred_check_branch
          %357 = sbr.rel (%p355) target = $region52
        $region51: #{tpu_custom_call.1} parent=11 // pred_region
          _
        $region52: #{tpu_custom_call.1} parent=11 // pred_fallthru
          _
      $region12: #{tpu_custom_call.1} parent=5 // pred_fallthru
        _
      %p358 = scmp.lt.s32.totalorder %s25, 2
      // Predicated region
      $region53: #{tpu_custom_call.1} parent=5 // pred_check
        %p359 = pneg %p358
      $region54: #{tpu_custom_call.1} parent=5 // pred_check_branch
        %361 = sbr.rel (%p359) target = $region56
      $region55: #{tpu_custom_call.1} parent=5 // pred_region
        // Predicated region
        $region57: #{tpu_custom_call.1} parent=55 // pred_check
          %p362 = pneg %p45
        $region58: #{tpu_custom_call.1} parent=55 // pred_check_branch
          %364 = sbr.rel (%p362) target = $region60
        $region59: #{tpu_custom_call.1} parent=55 // pred_region
          %p365 = scmp.lt.s32.totalorder %s25, 1
          %s366 = scalar_select %p365, %s25, 1
          %s367 = smul.addr %s366, 8
          %s368 = scalar_lea.vmem %s0, %s367
        $region60: #{tpu_custom_call.1} parent=55 // pred_fallthru
          _
      $region56: #{tpu_custom_call.1} parent=5 // pred_fallthru
        _
      %p369 = scmp.le.s32.totalorder 1, %s25
      %p370 = scmp.lt.s32.totalorder %s25, 3
      %p371 = pnand %p369, %p370
      %p372 = pneg %p371
      // Predicated region
      $region61: #{tpu_custom_call.1} parent=5 // pred_check
        _
      $region62: #{tpu_custom_call.1} parent=5 // pred_check_branch
        %374 = sbr.rel (%p371) target = $region64
      $region63: #{tpu_custom_call.1} parent=5 // pred_region
        %s375 = ssub.s32 %s25, 1
        %p376 = scmp.lt.s32.totalorder %s30, 1
        %s377 = scalar_select %p376, %s30, 1
        %s378 = smul.addr %s377, 8
        %s379 = scalar_lea.vmem %s0, %s378
        %p380 = pneg %p51
        %p381 = pneg %p48
        %p382 = pneg %p72
        %p383 = pneg %p69
        %p384 = pneg %p93
        %p385 = pneg %p90
        %p386 = pneg %p114
        %p387 = pneg %p111
        %p388 = pneg %p135
        %p389 = pneg %p132
        %p390 = pneg %p156
        %p391 = pneg %p153
        %p392 = pneg %p177
        %p393 = pneg %p174
        %p394 = pneg %p198
        %p395 = pneg %p195
        %p396 = pneg %p219
        %p397 = pneg %p216
        %p398 = pneg %p240
        %p399 = pneg %p237
        %p400 = pneg %p261
        %p401 = pneg %p258
        %p402 = pneg %p287
        %p403 = pneg %p284
        %s404 = sand.u32 %s274, 1
        %s405 = scalar_lea.sflag [#allocation3], %s404
        %s406 = sand.u32 %s274, 1
        %s407 = smul.addr %s406, 4
        %s408 = scalar_lea.vmem [#allocation2], %s407
        %p409 = pneg %p313
        %p410 = pneg %p310
        %s411 = sand.u32 %s300, 1
        %s412 = scalar_lea.sflag [#allocation5], %s411
        %s413 = sand.u32 %s300, 1
        %s414 = smul.addr %s413, 4
        %s415 = scalar_lea.vmem [#allocation4], %s414
        %p416 = scmp.lt.s32.totalorder %s30, 1
        %s417 = scalar_select %p416, %s30, 1
        %s418 = smul.addr %s417, 8
        %s419 = scalar_lea.vmem %s0, %s418
        %v420 = vld [vmem:[%s419] sm:$0xff]
        %v421 = vld [vmem:[%s1] sm:$0x1]
        %423 = vset.pattern.permute.xlu0 0
        %424 = vperm.xlu0 %423, %v420
        %v425 = vpop.permute.xlu0 %424
        %v427 = vlaneseq
        %v428 = vshrl.u32 %v427, 7
        %v429 = vsub.s32 0, %v428
        %v430 = vrot.slane %v421, %v429
        %v431 = vmul.f32 %v425, %v430
        %v432 = vld [vmem:[%s1 + $0x1] sm:$0x1]
        %433 = vset.pattern.permute.xlu0 1
        %434 = vperm.xlu0 %433, %v420
        %v435 = vpop.permute.xlu0 %434
        %v437 = vlaneseq
        %v438 = vshrl.u32 %v437, 7
        %v439 = vsub.s32 0, %v438
        %v440 = vrot.slane %v432, %v439
        %v441 = vmul.f32 %v435, %v440
        %v442 = vadd.f32 %v431, %v441
        %v443 = vld [vmem:[%s2] sm:$0x1]
        %v445 = vlaneseq
        %v446 = vshrl.u32 %v445, 7
        %v447 = vsub.s32 0, %v446
        %v448 = vrot.slane %v443, %v447
        %v450 = vadd.f32 %v442, %v448
        %v451 = vmax.f32 %v450, 0.0
        %v452 = vld [vmem:[%s3] sm:$0xff]
        %v453 = vld [vmem:[%s3 + $0x8] sm:$0xff]
        %v454 = vld [vmem:[%s3 + $0x10] sm:$0xff]
        %v455 = vld [vmem:[%s3 + $0x18] sm:$0xff]
        %v456 = vld [vmem:[%s4] sm:$0x1]
        %v458 = vlaneseq
        %v459 = vshrl.u32 %v458, 7
        %v460 = vsub.s32 0, %v459
        %v461 = vrot.slane %v456, %v460
        %vm463 = vcmask 261120
        %v465 = vsel %vm463, %v451, 0
        %467 = vmatprep.subr.mxu0 0.0
        %468 = vmatpush1.msra.mxu0 %v452
        %469 = vmatprep.subr.mxu0 0.0
        %470 = vmatpush1.msra.mxu0 %v453
        %471 = vmatprep.subr.mxu0 0.0
        %472 = vmatpush1.msra.mxu0 %v454
        %473 = vmatprep.subr.mxu0 0.0
        %474 = vmatpush1.msra.mxu0 %v455
        %475 = vmatprep.subr.mxu0 0.0
        %476 = vmatpush1.msra.mxu0 0.0
        %477 = vmatprep.subr.mxu0 0.0
        %478 = vmatpush1.msra.mxu0 0.0
        %479 = vmatprep.subr.mxu0 0.0
        %480 = vmatpush1.msra.mxu0 0.0
        %481 = vmatprep.subr.mxu0 0.0
        %482 = vmatpush1.msra.mxu0 0.0
        %483 = vmatprep.subr.mxu0 0.0
        %484 = vmatpush1.msra.mxu0 0.0
        %485 = vmatprep.subr.mxu0 0.0
        %486 = vmatpush1.msra.mxu0 0.0
        %487 = vmatprep.subr.mxu0 0.0
        %488 = vmatpush1.msra.mxu0 0.0
        %489 = vmatprep.subr.mxu0 0.0
        %490 = vmatpush1.msra.mxu0 0.0
        %491 = vmatprep.subr.mxu0 0.0
        %492 = vmatpush1.msra.mxu0 0.0
        %493 = vmatprep.subr.mxu0 0.0
        %494 = vmatpush1.msra.mxu0 0.0
        %495 = vmatprep.subr.mxu0 0.0
        %496 = vmatpush1.msra.mxu0 0.0
        %497 = vmatprep.subr.mxu0 0.0
        %498 = vmatpush1.msra.mxu0 0.0
        %499 = vmatprep.subr.mxu0 0.0
        %500 = vmatpush1.msra.mxu0 0.0
        %501 = vmatprep.subr.mxu0 0.0
        %502 = vmatpush1.msra.mxu0 0.0
        %503 = vmatprep.subr.mxu0 0.0
        %504 = vmatpush1.msra.mxu0 0.0
        %505 = vmatprep.subr.mxu0 0.0
        %506 = vmatpush1.msra.mxu0 0.0
        %507 = vmatprep.subr.mxu0 0.0
        %508 = vmatpush1.msra.mxu0 0.0
        %509 = vmatprep.subr.mxu0 0.0
        %510 = vmatpush1.msra.mxu0 0.0
        %511 = vmatprep.subr.mxu0 0.0
        %512 = vmatpush1.msra.mxu0 0.0
        %513 = vmatprep.subr.mxu0 0.0
        %514 = vmatpush1.msra.mxu0 0.0
        %515 = vmatprep.subr.mxu0 0.0
        %516 = vmatpush1.msra.mxu0 0.0
        %517 = vmatprep.subr.mxu0 0.0
        %518 = vmatpush1.msra.mxu0 0.0
        %519 = vmatprep.subr.mxu0 0.0
        %520 = vmatpush1.msra.mxu0 0.0
        %521 = vmatprep.subr.mxu0 0.0
        %522 = vmatpush1.msra.mxu0 0.0
        %523 = vmatprep.subr.mxu0 0.0
        %524 = vmatpush1.msra.mxu0 0.0
        %525 = vmatprep.subr.mxu0 0.0
        %526 = vmatpush1.msra.mxu0 0.0
        %527 = vmatprep.subr.mxu0 0.0
        %528 = vmatpush1.msra.mxu0 0.0
        %529 = vmatprep.subr.mxu0 0.0
        %530 = vmatpush1.msra.mxu0 0.0
        %531 = vmatprep.mubr.f32.mxu0 0.0
        %532 = vmatmul.mubr.f32.gmra.mrb[0].mxu0 %v465
        %v533 = vpop.f32.mrb[0].mxu0
        %v534 = vadd.f32 %v461, %v533
        %v535 = vpop.f32.mrb[0].mxu0
        %536 = vdwg.mxu0
        %v537 = vmax.f32 %v534, 0.0
        %v538 = vld [vmem:[%s5] sm:$0xff]
        %v539 = vld [vmem:[%s5 + $0x8] sm:$0xff]
        %v540 = vld [vmem:[%s5 + $0x10] sm:$0xff]
        %v541 = vld [vmem:[%s5 + $0x18] sm:$0xff]
        %v542 = vld [vmem:[%s5 + $0x20] sm:$0xff]
        %v543 = vld [vmem:[%s5 + $0x28] sm:$0xff]
        %v544 = vld [vmem:[%s5 + $0x30] sm:$0xff]
        %v545 = vld [vmem:[%s5 + $0x38] sm:$0xff]
        %v546 = vld [vmem:[%s6] sm:$0x1]
        %v548 = vlaneseq
        %v549 = vshrl.u32 %v548, 7
        %v550 = vsub.s32 0, %v549
        %v551 = vrot.slane %v546, %v550
        %vm553 = vcmask 523264
        %v555 = vsel %vm553, %v537, 0
        %557 = vmatprep.subr.mxu0 0.0
        %558 = vmatpush1.msra.mxu0 %v538
        %559 = vmatprep.subr.mxu0 0.0
        %560 = vmatpush1.msra.mxu0 %v539
        %561 = vmatprep.subr.mxu0 0.0
        %562 = vmatpush1.msra.mxu0 %v540
        %563 = vmatprep.subr.mxu0 0.0
        %564 = vmatpush1.msra.mxu0 %v541
        %565 = vmatprep.subr.mxu0 0.0
        %566 = vmatpush1.msra.mxu0 %v542
        %567 = vmatprep.subr.mxu0 0.0
        %568 = vmatpush1.msra.mxu0 %v543
        %569 = vmatprep.subr.mxu0 0.0
        %570 = vmatpush1.msra.mxu0 %v544
        %571 = vmatprep.subr.mxu0 0.0
        %572 = vmatpush1.msra.mxu0 %v545
        %573 = vmatprep.subr.mxu0 0.0
        %574 = vmatpush1.msra.mxu0 0.0
        %575 = vmatprep.subr.mxu0 0.0
        %576 = vmatpush1.msra.mxu0 0.0
        %577 = vmatprep.subr.mxu0 0.0
        %578 = vmatpush1.msra.mxu0 0.0
        %579 = vmatprep.subr.mxu0 0.0
        %580 = vmatpush1.msra.mxu0 0.0
        %581 = vmatprep.subr.mxu0 0.0
        %582 = vmatpush1.msra.mxu0 0.0
        %583 = vmatprep.subr.mxu0 0.0
        %584 = vmatpush1.msra.mxu0 0.0
        %585 = vmatprep.subr.mxu0 0.0
        %586 = vmatpush1.msra.mxu0 0.0
        %587 = vmatprep.subr.mxu0 0.0
        %588 = vmatpush1.msra.mxu0 0.0
        %589 = vmatprep.subr.mxu0 0.0
        %590 = vmatpush1.msra.mxu0 0.0
        %591 = vmatprep.subr.mxu0 0.0
        %592 = vmatpush1.msra.mxu0 0.0
        %593 = vmatprep.subr.mxu0 0.0
        %594 = vmatpush1.msra.mxu0 0.0
        %595 = vmatprep.subr.mxu0 0.0
        %596 = vmatpush1.msra.mxu0 0.0
        %597 = vmatprep.subr.mxu0 0.0
        %598 = vmatpush1.msra.mxu0 0.0
        %599 = vmatprep.subr.mxu0 0.0
        %600 = vmatpush1.msra.mxu0 0.0
        %601 = vmatprep.subr.mxu0 0.0
        %602 = vmatpush1.msra.mxu0 0.0
        %603 = vmatprep.subr.mxu0 0.0
        %604 = vmatpush1.msra.mxu0 0.0
        %605 = vmatprep.subr.mxu0 0.0
        %606 = vmatpush1.msra.mxu0 0.0
        %607 = vmatprep.subr.mxu0 0.0
        %608 = vmatpush1.msra.mxu0 0.0
        %609 = vmatprep.subr.mxu0 0.0
        %610 = vmatpush1.msra.mxu0 0.0
        %611 = vmatprep.subr.mxu0 0.0
        %612 = vmatpush1.msra.mxu0 0.0
        %613 = vmatprep.subr.mxu0 0.0
        %614 = vmatpush1.msra.mxu0 0.0
        %615 = vmatprep.subr.mxu0 0.0
        %616 = vmatpush1.msra.mxu0 0.0
        %617 = vmatprep.subr.mxu0 0.0
        %618 = vmatpush1.msra.mxu0 0.0
        %619 = vmatprep.subr.mxu0 0.0
        %620 = vmatpush1.msra.mxu0 0.0
        %621 = vmatprep.mubr.f32.mxu0 0.0
        %622 = vmatmul.mubr.f32.gmra.mrb[0].mxu0 %v555
        %v623 = vpop.f32.mrb[0].mxu0
        %v624 = vadd.f32 %v551, %v623
        %v625 = vpop.f32.mrb[0].mxu0
        %626 = vdwg.mxu0
        %v627 = vmax.f32 %v624, 0.0
        %v628 = vpack.c.bf16 %v627, %v627
        %629 = vst [vmem:[%s408] sm:$0xf] %v628
        %v630 = vld [vmem:[%s7] sm:$0xff]
        %v631 = vld [vmem:[%s7 + $0x8] sm:$0xff]
        %v632 = vld [vmem:[%s7 + $0x10] sm:$0xff]
        %v633 = vld [vmem:[%s7 + $0x18] sm:$0xff]
        %v634 = vld [vmem:[%s7 + $0x20] sm:$0xff]
        %v635 = vld [vmem:[%s7 + $0x28] sm:$0xff]
        %v636 = vld [vmem:[%s7 + $0x30] sm:$0xff]
        %v637 = vld [vmem:[%s7 + $0x38] sm:$0xff]
        %v638 = vld [vmem:[%s7 + $0x40] sm:$0xff]
        %v639 = vld [vmem:[%s7 + $0x48] sm:$0xff]
        %v640 = vld [vmem:[%s7 + $0x50] sm:$0xff]
        %v641 = vld [vmem:[%s7 + $0x58] sm:$0xff]
        %v642 = vld [vmem:[%s7 + $0x60] sm:$0xff]
        %v643 = vld [vmem:[%s7 + $0x68] sm:$0xff]
        %v644 = vld [vmem:[%s7 + $0x70] sm:$0xff]
        %v645 = vld [vmem:[%s7 + $0x78] sm:$0xff]
        %v646 = vld [vmem:[%s8] sm:$0x1]
        %v648 = vlaneseq
        %v649 = vshrl.u32 %v648, 7
        %v650 = vsub.s32 0, %v649
        %v651 = vrot.slane %v646, %v650
        %653 = vmatprep.subr.mxu0 0.0
        %654 = vmatpush1.msra.mxu0 %v630
        %655 = vmatprep.subr.mxu0 0.0
        %656 = vmatpush1.msra.mxu0 %v631
        %657 = vmatprep.subr.mxu0 0.0
        %658 = vmatpush1.msra.mxu0 %v632
        %659 = vmatprep.subr.mxu0 0.0
        %660 = vmatpush1.msra.mxu0 %v633
        %661 = vmatprep.subr.mxu0 0.0
        %662 = vmatpush1.msra.mxu0 %v634
        %663 = vmatprep.subr.mxu0 0.0
        %664 = vmatpush1.msra.mxu0 %v635
        %665 = vmatprep.subr.mxu0 0.0
        %666 = vmatpush1.msra.mxu0 %v636
        %667 = vmatprep.subr.mxu0 0.0
        %668 = vmatpush1.msra.mxu0 %v637
        %669 = vmatprep.subr.mxu0 0.0
        %670 = vmatpush1.msra.mxu0 %v638
        %671 = vmatprep.subr.mxu0 0.0
        %672 = vmatpush1.msra.mxu0 %v639
        %673 = vmatprep.subr.mxu0 0.0
        %674 = vmatpush1.msra.mxu0 %v640
        %675 = vmatprep.subr.mxu0 0.0
        %676 = vmatpush1.msra.mxu0 %v641
        %677 = vmatprep.subr.mxu0 0.0
        %678 = vmatpush1.msra.mxu0 %v642
        %679 = vmatprep.subr.mxu0 0.0
        %680 = vmatpush1.msra.mxu0 %v643
        %681 = vmatprep.subr.mxu0 0.0
        %682 = vmatpush1.msra.mxu0 %v644
        %683 = vmatprep.subr.mxu0 0.0
        %684 = vmatpush1.msra.mxu0 %v645
        %685 = vmatprep.subr.mxu0 0.0
        %686 = vmatpush1.msra.mxu0 0.0
        %687 = vmatprep.subr.mxu0 0.0
        %688 = vmatpush1.msra.mxu0 0.0
        %689 = vmatprep.subr.mxu0 0.0
        %690 = vmatpush1.msra.mxu0 0.0
        %691 = vmatprep.subr.mxu0 0.0
        %692 = vmatpush1.msra.mxu0 0.0
        %693 = vmatprep.subr.mxu0 0.0
        %694 = vmatpush1.msra.mxu0 0.0
        %695 = vmatprep.subr.mxu0 0.0
        %696 = vmatpush1.msra.mxu0 0.0
        %697 = vmatprep.subr.mxu0 0.0
        %698 = vmatpush1.msra.mxu0 0.0
        %699 = vmatprep.subr.mxu0 0.0
        %700 = vmatpush1.msra.mxu0 0.0
        %701 = vmatprep.subr.mxu0 0.0
        %702 = vmatpush1.msra.mxu0 0.0
        %703 = vmatprep.subr.mxu0 0.0
        %704 = vmatpush1.msra.mxu0 0.0
        %705 = vmatprep.subr.mxu0 0.0
        %706 = vmatpush1.msra.mxu0 0.0
        %707 = vmatprep.subr.mxu0 0.0
        %708 = vmatpush1.msra.mxu0 0.0
        %709 = vmatprep.subr.mxu0 0.0
        %710 = vmatpush1.msra.mxu0 0.0
        %711 = vmatprep.subr.mxu0 0.0
        %712 = vmatpush1.msra.mxu0 0.0
        %713 = vmatprep.subr.mxu0 0.0
        %714 = vmatpush1.msra.mxu0 0.0
        %715 = vmatprep.subr.mxu0 0.0
        %716 = vmatpush1.msra.mxu0 0.0
        %717 = vmatprep.mubr.f32.mxu0 0.0
        %718 = vmatmul.mubr.f32.gmra.mrb[0].mxu0 %v627
        %v719 = vpop.f32.mrb[0].mxu0
        %v720 = vadd.f32 %v651, %v719
        %v721 = vpop.f32.mrb[0].mxu0
        %722 = vdwg.mxu0
        %v723 = vmax.f32 %v720, 0.0
        %v724 = vld [vmem:[%s9] sm:$0xff]
        %v725 = vld [vmem:[%s9 + $0x8] sm:$0xff]
        %v726 = vld [vmem:[%s9 + $0x10] sm:$0xff]
        %v727 = vld [vmem:[%s9 + $0x18] sm:$0xff]
        %v728 = vld [vmem:[%s9 + $0x20] sm:$0xff]
        %v729 = vld [vmem:[%s9 + $0x28] sm:$0xff]
        %v730 = vld [vmem:[%s9 + $0x30] sm:$0xff]
        %v731 = vld [vmem:[%s9 + $0x38] sm:$0xff]
        %v732 = vld [vmem:[%s10] sm:$0x1]
        %v734 = vlaneseq
        %v735 = vshrl.u32 %v734, 7
        %v736 = vsub.s32 0, %v735
        %v737 = vrot.slane %v732, %v736
        %v740 = vsel %vm553, %v723, 0
        %742 = vmatprep.subr.mxu0 0.0
        %743 = vmatpush1.msra.mxu0 %v724
        %744 = vmatprep.subr.mxu0 0.0
        %745 = vmatpush1.msra.mxu0 %v725
        %746 = vmatprep.subr.mxu0 0.0
        %747 = vmatpush1.msra.mxu0 %v726
        %748 = vmatprep.subr.mxu0 0.0
        %749 = vmatpush1.msra.mxu0 %v727
        %750 = vmatprep.subr.mxu0 0.0
        %751 = vmatpush1.msra.mxu0 %v728
        %752 = vmatprep.subr.mxu0 0.0
        %753 = vmatpush1.msra.mxu0 %v729
        %754 = vmatprep.subr.mxu0 0.0
        %755 = vmatpush1.msra.mxu0 %v730
        %756 = vmatprep.subr.mxu0 0.0
        %757 = vmatpush1.msra.mxu0 %v731
        %758 = vmatprep.subr.mxu0 0.0
        %759 = vmatpush1.msra.mxu0 0.0
        %760 = vmatprep.subr.mxu0 0.0
        %761 = vmatpush1.msra.mxu0 0.0
        %762 = vmatprep.subr.mxu0 0.0
        %763 = vmatpush1.msra.mxu0 0.0
        %764 = vmatprep.subr.mxu0 0.0
        %765 = vmatpush1.msra.mxu0 0.0
        %766 = vmatprep.subr.mxu0 0.0
        %767 = vmatpush1.msra.mxu0 0.0
        %768 = vmatprep.subr.mxu0 0.0
        %769 = vmatpush1.msra.mxu0 0.0
        %770 = vmatprep.subr.mxu0 0.0
        %771 = vmatpush1.msra.mxu0 0.0
        %772 = vmatprep.subr.mxu0 0.0
        %773 = vmatpush1.msra.mxu0 0.0
        %774 = vmatprep.subr.mxu0 0.0
        %775 = vmatpush1.msra.mxu0 0.0
        %776 = vmatprep.subr.mxu0 0.0
        %777 = vmatpush1.msra.mxu0 0.0
        %778 = vmatprep.subr.mxu0 0.0
        %779 = vmatpush1.msra.mxu0 0.0
        %780 = vmatprep.subr.mxu0 0.0
        %781 = vmatpush1.msra.mxu0 0.0
        %782 = vmatprep.subr.mxu0 0.0
        %783 = vmatpush1.msra.mxu0 0.0
        %784 = vmatprep.subr.mxu0 0.0
        %785 = vmatpush1.msra.mxu0 0.0
        %786 = vmatprep.subr.mxu0 0.0
        %787 = vmatpush1.msra.mxu0 0.0
        %788 = vmatprep.subr.mxu0 0.0
        %789 = vmatpush1.msra.mxu0 0.0
        %790 = vmatprep.subr.mxu0 0.0
        %791 = vmatpush1.msra.mxu0 0.0
        %792 = vmatprep.subr.mxu0 0.0
        %793 = vmatpush1.msra.mxu0 0.0
        %794 = vmatprep.subr.mxu0 0.0
        %795 = vmatpush1.msra.mxu0 0.0
        %796 = vmatprep.subr.mxu0 0.0
        %797 = vmatpush1.msra.mxu0 0.0
        %798 = vmatprep.subr.mxu0 0.0
        %799 = vmatpush1.msra.mxu0 0.0
        %800 = vmatprep.subr.mxu0 0.0
        %801 = vmatpush1.msra.mxu0 0.0
        %802 = vmatprep.subr.mxu0 0.0
        %803 = vmatpush1.msra.mxu0 0.0
        %804 = vmatprep.subr.mxu0 0.0
        %805 = vmatpush1.msra.mxu0 0.0
        %806 = vmatprep.mubr.f32.mxu0 0.0
        %807 = vmatmul.mubr.f32.gmra.mrb[0].mxu0 %v740
        %v808 = vpop.f32.mrb[0].mxu0
        %v809 = vadd.f32 %v737, %v808
        %v810 = vpop.f32.mrb[0].mxu0
        %811 = vdwg.mxu0
        %v812 = vpack.c.bf16 %v809, %v809
        %813 = vst [vmem:[%s415] sm:$0xf] %v812
        %s814 = sand.u32 %s274, 1
        %s815 = scalar_lea.sflag [#allocation3], %s814
        %s816 = sand.u32 %s274, 1
        %s817 = smul.addr %s816, 4
        %s818 = scalar_lea.vmem [#allocation2], %s817
        %s819 = sand.u32 %s300, 1
        %s820 = scalar_lea.sflag [#allocation5], %s819
        %s821 = sand.u32 %s300, 1
        %s822 = smul.addr %s821, 4
        %s823 = scalar_lea.vmem [#allocation4], %s822
        // Predicated region
        $region65: #{tpu_custom_call.1} parent=63 // pred_check
          %p824 = pneg %p284
        $region66: #{tpu_custom_call.1} parent=63 // pred_check_branch
          %826 = sbr.rel (%p824) target = $region68
        $region67: #{tpu_custom_call.1} parent=63 // pred_region
          %s828 = ssub.s32 64, 64
          %829 = vsyncadd %s815, %s828
          %s830 = smul.addr %s30, 64
          %s831 = scalar_lea.hbm %s11, %s830
          %s833 = sshll.u32 %s818, 4
          %s834 = int_to_ptr.vmem [resolvable:$true] %s833
          %836 = dma.vmem_to_hbm [thread:$0]  %s834, 64, %s831, %s815
        $region68: #{tpu_custom_call.1} parent=63 // pred_fallthru
          _
        // Predicated region
        $region69: #{tpu_custom_call.1} parent=63 // pred_check
          %p837 = pneg %p310
        $region70: #{tpu_custom_call.1} parent=63 // pred_check_branch
          %839 = sbr.rel (%p837) target = $region72
        $region71: #{tpu_custom_call.1} parent=63 // pred_region
          %s841 = ssub.s32 64, 64
          %842 = vsyncadd %s820, %s841
          %s843 = smul.addr %s30, 64
          %s844 = scalar_lea.hbm %s12, %s843
          %s846 = sshll.u32 %s823, 4
          %s847 = int_to_ptr.vmem [resolvable:$true] %s846
          %849 = dma.vmem_to_hbm [thread:$0]  %s847, 64, %s844, %s820
        $region72: #{tpu_custom_call.1} parent=63 // pred_fallthru
          _
      $region64: #{tpu_custom_call.1} parent=5 // pred_fallthru
        _
      %p850 = scmp.le.s32.totalorder 2, %s25
      // Predicated region
      $region73: #{tpu_custom_call.1} parent=5 // pred_check
        %p851 = pneg %p850
      $region74: #{tpu_custom_call.1} parent=5 // pred_check_branch
        %853 = sbr.rel (%p851) target = $region76
      $region75: #{tpu_custom_call.1} parent=5 // pred_region
        %s854 = ssub.s32 %s25, 2
        // Predicated region
        $region77: #{tpu_custom_call.1} parent=75 // pred_check
          %p855 = pneg %p290
        $region78: #{tpu_custom_call.1} parent=75 // pred_check_branch
          %857 = sbr.rel (%p855) target = $region80
        $region79: #{tpu_custom_call.1} parent=75 // pred_region
          %s858 = sand.u32 %s275, 1
          %s859 = scalar_lea.sflag [#allocation3], %s858
          %s860 = sand.u32 %s275, 1
          %s861 = smul.addr %s860, 4
          %s862 = scalar_lea.vmem [#allocation2], %s861
          %863 = dma.done %s859, 64
        $region80: #{tpu_custom_call.1} parent=75 // pred_fallthru
          _
        // Predicated region
        $region81: #{tpu_custom_call.1} parent=75 // pred_check
          %p864 = pneg %p316
        $region82: #{tpu_custom_call.1} parent=75 // pred_check_branch
          %866 = sbr.rel (%p864) target = $region84
        $region83: #{tpu_custom_call.1} parent=75 // pred_region
          %s867 = sand.u32 %s301, 1
          %s868 = scalar_lea.sflag [#allocation5], %s867
          %s869 = sand.u32 %s301, 1
          %s870 = smul.addr %s869, 4
          %s871 = scalar_lea.vmem [#allocation4], %s870
          %872 = dma.done %s868, 64
        $region84: #{tpu_custom_call.1} parent=75 // pred_fallthru
          _
      $region76: #{tpu_custom_call.1} parent=5 // pred_fallthru
        _
    $region6: #{tpu_custom_call.1} parent=1 // loop_footer
      %s29 = sadd.s32 1, %s25
    $region7: #{tpu_custom_call.1} parent=1 // loop_footer_branch
      %24 = sbr.rel target = $region3
    $region8: #{tpu_custom_call.1} parent=1 // loop_exit
      _
    %873 = vsyncpa [#allocation3], 1
    %s874 = scalar_lea.sflag [#allocation3], 1
    %875 = vsyncpa %s874, 1
    %876 = vsyncpa [#allocation5], 1
    %s877 = scalar_lea.sflag [#allocation5], 1
    %878 = vsyncpa %s877, 1

</llo_original>
